<compile_context>
chip_gen: v5e
topology: v5e:2x2
jax: 0.10.0
libtpu: 0.0.40
codegen_flags: <defaults>
</compile_context>

<pallas_src>
import functools

import jax
import jax.numpy as jnp
from jax import lax
from jax.experimental import pallas as pl
from jax.experimental.pallas import tpu as pltpu

LANES = 128
TARGET_BLOCK_BYTES = 2 * 1024 * 1024  # ~2 MiB per input per block (safe on v5e/v6e/v7x)


def _diff_loss_kernel(d_valid, inv_d1d2, col_tile,
                      x1_ref, x2_ref, o_ref, g1_acc, g2_acc):
    i = pl.program_id(0)
    b = x1_ref.shape[0]

    @pl.when(i == 0)
    def _():
        g1_acc[...] = jnp.zeros_like(g1_acc)
        g2_acc[...] = jnp.zeros_like(g2_acc)

    # Column-validity mask (handles a partial / overrunning last tile).
    col_ids = i * col_tile + lax.broadcasted_iota(jnp.int32, (b, col_tile), 1)
    valid = col_ids < d_valid

    x1 = jnp.where(valid, x1_ref[...].astype(jnp.float32), 0.0)
    x2 = jnp.where(valid, x2_ref[...].astype(jnp.float32), 0.0)

    # Center each column over the batch dimension (tile-local, exact).
    x1 = x1 - jnp.mean(x1, axis=0, keepdims=True)
    x2 = x2 - jnp.mean(x2, axis=0, keepdims=True)

    # Accumulate the centered Gram matrices G = Xc @ Xc^T  ([B, B]) on the MXU.
    dn = (((1,), (1,)), ((), ()))
    g1_acc[...] += lax.dot_general(x1, x1, dn, preferred_element_type=jnp.float32)
    g2_acc[...] += lax.dot_general(x2, x2, dn, preferred_element_type=jnp.float32)

    @pl.when(i == pl.num_programs(0) - 1)
    def _():
        g1 = g1_acc[...]
        g2 = g2_acc[...]
        rows = lax.broadcasted_iota(jnp.int32, (b, b), 0)
        cols = lax.broadcasted_iota(jnp.int32, (b, b), 1)
        eye = rows == cols
        # diag(G)[a] = || centered row a ||^2 ; extract as both column and row.
        d1c = jnp.sum(jnp.where(eye, g1, 0.0), axis=1, keepdims=True)  # [B, 1]
        d1r = jnp.sum(jnp.where(eye, g1, 0.0), axis=0, keepdims=True)  # [1, B]
        d2c = jnp.sum(jnp.where(eye, g2, 0.0), axis=1, keepdims=True)
        d2r = jnp.sum(jnp.where(eye, g2, 0.0), axis=0, keepdims=True)
        eps = jnp.float32(1e-6)
        g1n = g1 * (1.0 / (jnp.sqrt(d1c) + eps)) * (1.0 / (jnp.sqrt(d1r) + eps))
        g2n = g2 * (1.0 / (jnp.sqrt(d2c) + eps)) * (1.0 / (jnp.sqrt(d2r) + eps))
        # mean((X1n^T X2n)^2) = sum(G1n * G2n) / (D1 * D2)
        o_ref[0, 0] = jnp.sum(g1n * g2n) * jnp.float32(inv_d1d2)


def diff_loss_pallas(input1, input2):
    assert input1.shape[0] == input2.shape[0], "batch sizes must match"
    b = input1.shape[0]
    x1 = input1.reshape(b, -1)   # contiguous flatten: no HBM copy
    x2 = input2.reshape(b, -1)
    d1 = x1.shape[1]
    d2 = x2.shape[1]

    # Common column extent for the shared grid; zero columns contribute nothing
    # to the Gram accumulators, so padding the shorter input is semantically safe.
    dc = max(d1, d2)
    if d1 < dc:
        x1 = jnp.pad(x1, ((0, 0), (0, dc - d1)))
    if d2 < dc:
        x2 = jnp.pad(x2, ((0, 0), (0, dc - d2)))

    itemsize = max(jnp.dtype(x1.dtype).itemsize, jnp.dtype(x2.dtype).itemsize)
    col_tile = (TARGET_BLOCK_BYTES // max(1, b * itemsize)) // LANES * LANES
    col_tile = max(col_tile, LANES)
    if dc % LANES == 0:
        col_tile = min(col_tile, dc)
    else:
        # Block equal to the full (unaligned) extent is always legal.
        # TODO(synk): tile + mask the unaligned-and-huge-D case instead of one block.
        col_tile = dc
    num_tiles = pl.cdiv(dc, col_tile)

    inv_d1d2 = 1.0 / (float(d1) * float(d2))
    kernel = functools.partial(_diff_loss_kernel, dc, inv_d1d2, col_tile)

    out = pl.pallas_call(
        kernel,
        out_shape=jax.ShapeDtypeStruct((1, 1), jnp.float32),
        grid_spec=pltpu.PrefetchScalarGridSpec(
            num_scalar_prefetch=0,
            grid=(num_tiles,),
            in_specs=[
                pl.BlockSpec((b, col_tile), lambda i: (0, i)),
                pl.BlockSpec((b, col_tile), lambda i: (0, i)),
            ],
            out_specs=pl.BlockSpec((1, 1), lambda i: (0, 0),
                                   memory_space=pltpu.SMEM),
            scratch_shapes=[
                pltpu.VMEM((b, b), jnp.float32),
                pltpu.VMEM((b, b), jnp.float32),
            ],
        ),
        compiler_params=pltpu.CompilerParams(
            dimension_semantics=("arbitrary",),
        ),
    )(x1, x2)

    return out[0, 0]


def diff_loss_ref(input1, input2):
    """Plain-JAX transcription of the PyTorch module (the spec)."""
    b = input1.shape[0]
    x1 = input1.reshape(b, -1)
    x2 = input2.reshape(b, -1)
    x1 = x1 - jnp.mean(x1, axis=0, keepdims=True)
    x2 = x2 - jnp.mean(x2, axis=0, keepdims=True)
    n1 = jnp.sqrt(jnp.sum(x1 * x1, axis=1, keepdims=True))
    n2 = jnp.sqrt(jnp.sum(x2 * x2, axis=1, keepdims=True))
    x1n = x1 / (n1 + 1e-6)
    x2n = x2 / (n2 + 1e-6)
    c = jnp.matmul(x1n.T, x2n, precision=lax.Precision.HIGHEST)
    return jnp.mean(c * c)


if __name__ == "__main__":
    key = jax.random.PRNGKey(0)
    k1, k2 = jax.random.split(key)

    shape = (2, 4, 16, 16)  # (batch, channels, H, W) -> flattened to (2, 1024)
    input1 = jax.random.normal(k1, shape, dtype=jnp.float32)
    input2 = jax.random.normal(k2, shape, dtype=jnp.float32)

    loss = diff_loss_pallas(input1, input2)
    jax.block_until_ready(loss)

    ref = diff_loss_ref(input1, input2)
    assert jnp.allclose(loss, ref, rtol=2e-3, atol=1e-8), (loss, ref)

    print("KERNEL_OK")
</pallas_src>

<mosaic_0001>
module attributes {stable_mosaic.version = 11 : i64} {
  func.func @_diff_loss_kernel(%arg0: i32, %arg1: memref<2x1024xf32, #tpu.memory_space<vmem>>, %arg2: memref<2x1024xf32, #tpu.memory_space<vmem>>, %arg3: memref<1x1xf32, #tpu.memory_space<smem>>, %arg4: memref<2x2xf32, #tpu.memory_space<vmem>>, %arg5: memref<2x2xf32, #tpu.memory_space<vmem>>) attributes {dimension_semantics = [#tpu.dimension_semantics<arbitrary>], iteration_bounds = array<i64: 1>, scalar_prefetch = 0 : i64, scratch_operands = 2 : i64, tpu.core_type = #tpu.core_type<tc>, window_params = [{transform_indices = @transform_0, window_bounds = array<i64: 2, 1024>}, {transform_indices = @transform_1, window_bounds = array<i64: 2, 1024>}, {transform_indices = @transform_2, window_bounds = array<i64: 1, 1>}]} {
    %c0_i32 = arith.constant 0 : i32
    %0 = arith.cmpi eq, %arg0, %c0_i32 : i32
    %1 = arith.extui %0 : i1 to i32
    %c0_i32_0 = arith.constant 0 : i32
    %2 = arith.cmpi ne, %1, %c0_i32_0 : i32
    scf.if %2 {
      %cst_22 = arith.constant 0.000000e+00 : f32
      %38 = vector.broadcast %cst_22 : f32 to vector<2x2xf32>
      %c0_23 = arith.constant 0 : index
      %c0_24 = arith.constant 0 : index
      %39 = vector.load %arg4[%c0_23, %c0_24] : memref<2x2xf32, #tpu.memory_space<vmem>>, vector<2x2xf32>
      tpu.vector_store %arg4[%c0_23, %c0_24], %38 {strides = array<i32>} : memref<2x2xf32, #tpu.memory_space<vmem>>, vector<2x2xf32>,
      %cst_25 = arith.constant 0.000000e+00 : f32
      %40 = vector.broadcast %cst_25 : f32 to vector<2x2xf32>
      %c0_26 = arith.constant 0 : index
      %c0_27 = arith.constant 0 : index
      %41 = vector.load %arg5[%c0_26, %c0_27] : memref<2x2xf32, #tpu.memory_space<vmem>>, vector<2x2xf32>
      tpu.vector_store %arg5[%c0_26, %c0_27], %40 {strides = array<i32>} : memref<2x2xf32, #tpu.memory_space<vmem>>, vector<2x2xf32>,
    } else {
    }
    %c1024_i32 = arith.constant 1024 : i32
    %3 = arith.muli %arg0, %c1024_i32 : i32
    %4 = tpu.iota {dimensions = array<i32: 1>} : vector<2x1024xi32>
    %5 = vector.broadcast %3 : i32 to vector<2x1024xi32>
    %6 = arith.addi %5, %4 : vector<2x1024xi32>
    %c1024_i32_1 = arith.constant 1024 : i32
    %7 = vector.broadcast %c1024_i32_1 : i32 to vector<2x1024xi32>
    %8 = arith.cmpi slt, %6, %7 : vector<2x1024xi32>
    %c0 = arith.constant 0 : index
    %c0_2 = arith.constant 0 : index
    %9 = vector.load %arg1[%c0, %c0_2] : memref<2x1024xf32, #tpu.memory_space<vmem>>, vector<2x1024xf32>
    %cst = arith.constant 0.000000e+00 : f32
    %10 = vector.broadcast %cst : f32 to vector<2x1024xf32>
    %11 = arith.select %8, %9, %10 : vector<2x1024xi1>, vector<2x1024xf32>
    %c0_3 = arith.constant 0 : index
    %c0_4 = arith.constant 0 : index
    %12 = vector.load %arg2[%c0_3, %c0_4] : memref<2x1024xf32, #tpu.memory_space<vmem>>, vector<2x1024xf32>
    %cst_5 = arith.constant 0.000000e+00 : f32
    %13 = vector.broadcast %cst_5 : f32 to vector<2x1024xf32>
    %14 = arith.select %8, %12, %13 : vector<2x1024xi1>, vector<2x1024xf32>
    %cst_6 = arith.constant dense<0.000000e+00> : vector<1024xf32>
    %15 = vector.multi_reduction <add>, %11, %cst_6 [0] : vector<2x1024xf32> to vector<1024xf32>
    %16 = vector.shape_cast %15 : vector<1024xf32> to vector<1x1024xf32>
    %cst_7 = arith.constant 2.000000e+00 : f32
    %17 = vector.broadcast %cst_7 : f32 to vector<1x1024xf32>
    %18 = arith.divf %16, %17 : vector<1x1024xf32>
    %19 = vector.broadcast %18 : vector<1x1024xf32> to vector<2x1024xf32>
    %20 = arith.subf %11, %19 : vector<2x1024xf32>
    %cst_8 = arith.constant dense<0.000000e+00> : vector<1024xf32>
    %21 = vector.multi_reduction <add>, %14, %cst_8 [0] : vector<2x1024xf32> to vector<1024xf32>
    %22 = vector.shape_cast %21 : vector<1024xf32> to vector<1x1024xf32>
    %cst_9 = arith.constant 2.000000e+00 : f32
    %23 = vector.broadcast %cst_9 : f32 to vector<1x1024xf32>
    %24 = arith.divf %22, %23 : vector<1x1024xf32>
    %25 = vector.broadcast %24 : vector<1x1024xf32> to vector<2x1024xf32>
    %26 = arith.subf %14, %25 : vector<2x1024xf32>
    %c0_10 = arith.constant 0 : index
    %c0_11 = arith.constant 0 : index
    %27 = vector.load %arg4[%c0_10, %c0_11] : memref<2x2xf32, #tpu.memory_space<vmem>>, vector<2x2xf32>
    %cst_12 = arith.constant dense<0.000000e+00> : vector<2x2xf32>
    %28 = tpu.matmul %20, %20, %cst_12 {dimension_numbers = #tpu.dot_dimension_numbers<[1], [1], [0], [0], [0, 0, 1, 0], [], []>} : vector<2x1024xf32>, vector<2x1024xf32>, vector<2x2xf32> -> vector<2x2xf32>
    %29 = arith.addf %27, %28 : vector<2x2xf32>
    %c0_13 = arith.constant 0 : index
    %c0_14 = arith.constant 0 : index
    %30 = vector.load %arg4[%c0_13, %c0_14] : memref<2x2xf32, #tpu.memory_space<vmem>>, vector<2x2xf32>
    tpu.vector_store %arg4[%c0_13, %c0_14], %29 {strides = array<i32>} : memref<2x2xf32, #tpu.memory_space<vmem>>, vector<2x2xf32>,
    %c0_15 = arith.constant 0 : index
    %c0_16 = arith.constant 0 : index
    %31 = vector.load %arg5[%c0_15, %c0_16] : memref<2x2xf32, #tpu.memory_space<vmem>>, vector<2x2xf32>
    %cst_17 = arith.constant dense<0.000000e+00> : vector<2x2xf32>
    %32 = tpu.matmul %26, %26, %cst_17 {dimension_numbers = #tpu.dot_dimension_numbers<[1], [1], [0], [0], [0, 0, 1, 0], [], []>} : vector<2x1024xf32>, vector<2x1024xf32>, vector<2x2xf32> -> vector<2x2xf32>
    %33 = arith.addf %31, %32 : vector<2x2xf32>
    %c0_18 = arith.constant 0 : index
    %c0_19 = arith.constant 0 : index
    %34 = vector.load %arg5[%c0_18, %c0_19] : memref<2x2xf32, #tpu.memory_space<vmem>>, vector<2x2xf32>
    tpu.vector_store %arg5[%c0_18, %c0_19], %33 {strides = array<i32>} : memref<2x2xf32, #tpu.memory_space<vmem>>, vector<2x2xf32>,
    %c0_i32_20 = arith.constant 0 : i32
    %35 = arith.cmpi eq, %arg0, %c0_i32_20 : i32
    %36 = arith.extui %35 : i1 to i32
    %c0_i32_21 = arith.constant 0 : i32
    %37 = arith.cmpi ne, %36, %c0_i32_21 : i32
    scf.if %37 {
      %c0_22 = arith.constant 0 : index
      %c0_23 = arith.constant 0 : index
      %38 = vector.load %arg4[%c0_22, %c0_23] : memref<2x2xf32, #tpu.memory_space<vmem>>, vector<2x2xf32>
      %c0_24 = arith.constant 0 : index
      %c0_25 = arith.constant 0 : index
      %39 = vector.load %arg5[%c0_24, %c0_25] : memref<2x2xf32, #tpu.memory_space<vmem>>, vector<2x2xf32>
      %40 = tpu.iota {dimensions = array<i32: 0>} : vector<2x2xi32>
      %41 = tpu.iota {dimensions = array<i32: 1>} : vector<2x2xi32>
      %42 = arith.cmpi eq, %40, %41 : vector<2x2xi32>
      %cst_26 = arith.constant 0.000000e+00 : f32
      %43 = vector.broadcast %cst_26 : f32 to vector<2x2xf32>
      %44 = arith.select %42, %38, %43 : vector<2x2xi1>, vector<2x2xf32>
      %cst_27 = arith.constant dense<0.000000e+00> : vector<2xf32>
      %45 = vector.multi_reduction <add>, %44, %cst_27 [1] : vector<2x2xf32> to vector<2xf32>
      %46 = vector.shape_cast %45 : vector<2xf32> to vector<2x1xf32>
      %cst_28 = arith.constant 0.000000e+00 : f32
      %47 = vector.broadcast %cst_28 : f32 to vector<2x2xf32>
      %48 = arith.select %42, %38, %47 : vector<2x2xi1>, vector<2x2xf32>
      %cst_29 = arith.constant dense<0.000000e+00> : vector<2xf32>
      %49 = vector.multi_reduction <add>, %48, %cst_29 [0] : vector<2x2xf32> to vector<2xf32>
      %50 = vector.shape_cast %49 : vector<2xf32> to vector<1x2xf32>
      %cst_30 = arith.constant 0.000000e+00 : f32
      %51 = vector.broadcast %cst_30 : f32 to vector<2x2xf32>
      %52 = arith.select %42, %39, %51 : vector<2x2xi1>, vector<2x2xf32>
      %cst_31 = arith.constant dense<0.000000e+00> : vector<2xf32>
      %53 = vector.multi_reduction <add>, %52, %cst_31 [1] : vector<2x2xf32> to vector<2xf32>
      %54 = vector.shape_cast %53 : vector<2xf32> to vector<2x1xf32>
      %cst_32 = arith.constant 0.000000e+00 : f32
      %55 = vector.broadcast %cst_32 : f32 to vector<2x2xf32>
      %56 = arith.select %42, %39, %55 : vector<2x2xi1>, vector<2x2xf32>
      %cst_33 = arith.constant dense<0.000000e+00> : vector<2xf32>
      %57 = vector.multi_reduction <add>, %56, %cst_33 [0] : vector<2x2xf32> to vector<2xf32>
      %58 = vector.shape_cast %57 : vector<2xf32> to vector<1x2xf32>
      %59 = math.sqrt %46 : vector<2x1xf32>
      %cst_34 = arith.constant 9.99999997E-7 : f32
      %60 = vector.broadcast %cst_34 : f32 to vector<2x1xf32>
      %61 = arith.addf %59, %60 : vector<2x1xf32>
      %cst_35 = arith.constant 1.000000e+00 : f32
      %62 = vector.broadcast %cst_35 : f32 to vector<2x1xf32>
      %63 = arith.divf %62, %61 : vector<2x1xf32>
      %64 = vector.broadcast %63 : vector<2x1xf32> to vector<2x2xf32>
      %65 = arith.mulf %38, %64 : vector<2x2xf32>
      %66 = math.sqrt %50 : vector<1x2xf32>
      %cst_36 = arith.constant 9.99999997E-7 : f32
      %67 = vector.broadcast %cst_36 : f32 to vector<1x2xf32>
      %68 = arith.addf %66, %67 : vector<1x2xf32>
      %cst_37 = arith.constant 1.000000e+00 : f32
      %69 = vector.broadcast %cst_37 : f32 to vector<1x2xf32>
      %70 = arith.divf %69, %68 : vector<1x2xf32>
      %71 = vector.broadcast %70 : vector<1x2xf32> to vector<2x2xf32>
      %72 = arith.mulf %65, %71 : vector<2x2xf32>
      %73 = math.sqrt %54 : vector<2x1xf32>
      %cst_38 = arith.constant 9.99999997E-7 : f32
      %74 = vector.broadcast %cst_38 : f32 to vector<2x1xf32>
      %75 = arith.addf %73, %74 : vector<2x1xf32>
      %cst_39 = arith.constant 1.000000e+00 : f32
      %76 = vector.broadcast %cst_39 : f32 to vector<2x1xf32>
      %77 = arith.divf %76, %75 : vector<2x1xf32>
      %78 = vector.broadcast %77 : vector<2x1xf32> to vector<2x2xf32>
      %79 = arith.mulf %39, %78 : vector<2x2xf32>
      %80 = math.sqrt %58 : vector<1x2xf32>
      %cst_40 = arith.constant 9.99999997E-7 : f32
      %81 = vector.broadcast %cst_40 : f32 to vector<1x2xf32>
      %82 = arith.addf %80, %81 : vector<1x2xf32>
      %cst_41 = arith.constant 1.000000e+00 : f32
      %83 = vector.broadcast %cst_41 : f32 to vector<1x2xf32>
      %84 = arith.divf %83, %82 : vector<1x2xf32>
      %85 = vector.broadcast %84 : vector<1x2xf32> to vector<2x2xf32>
      %86 = arith.mulf %79, %85 : vector<2x2xf32>
      %87 = arith.mulf %72, %86 : vector<2x2xf32>
      %88 = vector.shape_cast %87 : vector<2x2xf32> to vector<1x2x2xf32>
      %cst_42 = arith.constant dense<0.000000e+00> : vector<1xf32>
      %89 = vector.multi_reduction <add>, %88, %cst_42 [1, 2] : vector<1x2x2xf32> to vector<1xf32>
      %90 = vector.shape_cast %89 : vector<1xf32> to vector<1x1x1xf32>
      %91 = vector.extract %90[0, 0, 0] : f32 from vector<1x1x1xf32>
      %cst_43 = arith.constant 9.53674316E-7 : f32
      %92 = arith.mulf %91, %cst_43 : f32
      %c0_44 = arith.constant 0 : index
      %c0_45 = arith.constant 0 : index
      %93 = memref.load %arg3[%c0_44, %c0_45] : memref<1x1xf32, #tpu.memory_space<smem>>
      memref.store %92, %arg3[%c0_44, %c0_45] : memref<1x1xf32, #tpu.memory_space<smem>>
    } else {
    }
    return
  }
  func.func @transform_0(%arg0: i32) -> (i32, i32) {
    %c0_i32 = arith.constant 0 : i32
    %c0_i32_0 = arith.constant 0 : i32
    return %c0_i32, %arg0 : i32, i32
  }
  func.func @transform_1(%arg0: i32) -> (i32, i32) {
    %c0_i32 = arith.constant 0 : i32
    %c0_i32_0 = arith.constant 0 : i32
    return %c0_i32, %arg0 : i32, i32
  }
  func.func @transform_2(%arg0: i32) -> (i32, i32) {
    %c0_i32 = arith.constant 0 : i32
    %c0_i32_0 = arith.constant 0 : i32
    %c0_i32_1 = arith.constant 0 : i32
    return %c0_i32, %c0_i32_0 : i32, i32
  }
}

</mosaic_0001>

<llo_original>
// kernel: tpu_custom_call.1
$region0: #{tpu_custom_call.1}
  #allocation0 [shape = 'u32[]', space=smem, size = 0x4, offset = 0x4, fixed_abs, tag = 'smem constant byte address 0x4 - core index']
  #allocation1 [shape = 'u32[72,128]{1,0:T(1,128)}', space=vmem, size = 0x9000, scoped, tag = 'internal scratch']
  #allocation2 [shape = 'f32[2,2]{1,0:T(2,128)}', space=vmem, size = 0x400, scoped, tag = 'scratch operand']
  #allocation3 [shape = 'f32[2,2]{1,0:T(2,128)}', space=vmem, size = 0x400, scoped, tag = 'scratch operand']
  %s0 = inlined_call_operand.hbm [shape: f32[2,1024], index: 0, kind: input, shape index: {}]
  %s1 = inlined_call_operand.hbm [shape: f32[2,1024], index: 1, kind: input, shape index: {}]
  %s2 = inlined_call_operand.hbm [shape: f32[1,1], index: 2, kind: output, shape index: {}]
  %s3 = sld [smem:[#allocation0]]
  $region34: #{tpu_custom_call.1} parent=0
    _
  %s5 = ssub.s32 1, %s3
  %s6 = scalar_select 0, %s5, %s3
  $region1: #{tpu_custom_call.1} parent=0
    #allocation4 [shape = 'u8[8192]{0}', space=vmem, size = 0x2000, scoped, tag = 'input window, operand 0, single buffered']
    #allocation5 [shape = 's32[1]{0}', space=sflag, size = 0x4, scoped, tag = 'scoped memory for tpu_custom_call.1']
    #allocation6 [shape = 's32[1]{0}', space=sflag, size = 0x4, scoped, tag = 'scoped memory for tpu_custom_call.1']
    #allocation7 [shape = 'u8[8192]{0}', space=vmem, size = 0x2000, scoped, tag = 'input window, operand 1, single buffered']
    #allocation8 [shape = 's32[1]{0}', space=sflag, size = 0x4, scoped, tag = 'scoped memory for tpu_custom_call.1']
    #allocation9 [shape = 'u8[512]{0}', space=smem, size = 0x200, scoped, tag = 'output window, operand 0, single buffered']
    %7 = vsyncpa [#allocation5], 0
    %8 = vsyncpa [#allocation8], 0
    %9 = vsyncpa [#allocation6], 0
    // Predicated region
    $region2: #{tpu_custom_call.1} parent=1 // pred_check
      _
    $region3: #{tpu_custom_call.1} parent=1 // pred_check_branch
      %11 = sbr.rel (0) target = $region5
    $region4: #{tpu_custom_call.1} parent=1 // pred_region
      %13 = vsyncadd [#allocation5], 0
      %s15 = sshll.u32 %s0, 4
      %s16 = int_to_ptr.hbm [resolvable:$true] %s15
      %s17 = sshll.u32 [#allocation4], 4
      %s18 = int_to_ptr.vmem [resolvable:$true] %s17
      %20 = dma.hbm_to_vmem [thread:$0]  %s16, 256, %s18, [#allocation5]
    $region5: #{tpu_custom_call.1} parent=1 // pred_fallthru
      _
    // Predicated region
    $region6: #{tpu_custom_call.1} parent=1 // pred_check
      _
    $region7: #{tpu_custom_call.1} parent=1 // pred_check_branch
      %22 = sbr.rel (0) target = $region9
    $region8: #{tpu_custom_call.1} parent=1 // pred_region
      %24 = vsyncadd [#allocation8], 0
      %s26 = sshll.u32 %s1, 4
      %s27 = int_to_ptr.hbm [resolvable:$true] %s26
      %s28 = sshll.u32 [#allocation7], 4
      %s29 = int_to_ptr.vmem [resolvable:$true] %s28
      %31 = dma.hbm_to_vmem [thread:$0]  %s27, 256, %s29, [#allocation8]
    $region9: #{tpu_custom_call.1} parent=1 // pred_fallthru
      _
    // Predicated region
    $region10: #{tpu_custom_call.1} parent=1 // pred_check
      _
    $region11: #{tpu_custom_call.1} parent=1 // pred_check_branch
      %33 = sbr.rel (0) target = $region13
    $region12: #{tpu_custom_call.1} parent=1 // pred_region
      %35 = dma.done [#allocation5], 256
    $region13: #{tpu_custom_call.1} parent=1 // pred_fallthru
      _
    // Predicated region
    $region14: #{tpu_custom_call.1} parent=1 // pred_check
      _
    $region15: #{tpu_custom_call.1} parent=1 // pred_check_branch
      %37 = sbr.rel (0) target = $region17
    $region16: #{tpu_custom_call.1} parent=1 // pred_region
      %39 = dma.done [#allocation8], 256
    $region17: #{tpu_custom_call.1} parent=1 // pred_fallthru
      _
    %p40 = scmp.eq.s32.totalorder 0, 0
    // Predicated region
    $region18: #{tpu_custom_call.1} parent=1 // pred_check
      %p41 = pneg %p40
    $region19: #{tpu_custom_call.1} parent=1 // pred_check_branch
      %43 = sbr.rel (%p41) target = $region21
    $region20: #{tpu_custom_call.1} parent=1 // pred_region
      %vm44 = vcmask 9216
      %45 = vst.msk [vmem:[#allocation2] sm:$0x3] %vm44, 0.0
      %46 = vst.msk [vmem:[#allocation3] sm:$0x3] %vm44, 0.0
    $region21: #{tpu_custom_call.1} parent=1 // pred_fallthru
      _
    %s47 = smul.u32 0, 1024
    %v48 = vlaneseq
    %v49 = vand.u32 %v48, 127
    %v50 = vadd.s32 %v49, 128
    %v51 = vadd.s32 %v49, 256
    %v52 = vadd.s32 %v49, 384
    %v53 = vadd.s32 %v49, 512
    %v54 = vadd.s32 %v49, 640
    %v55 = vadd.s32 %v49, 768
    %v56 = vadd.s32 %v49, 896
    %v57 = vstv %s47
    %v58 = vadd.s32 %v57, %v49
    %v59 = vadd.s32 %v57, %v50
    %v60 = vadd.s32 %v57, %v51
    %v61 = vadd.s32 %v57, %v52
    %v62 = vadd.s32 %v57, %v53
    %v63 = vadd.s32 %v57, %v54
    %v64 = vadd.s32 %v57, %v55
    %v65 = vadd.s32 %v57, %v56
    %vm66 = vcmp.lt.s32.totalorder %v58, 1024
    %vm67 = vcmp.lt.s32.totalorder %v59, 1024
    %vm68 = vcmp.lt.s32.totalorder %v60, 1024
    %vm69 = vcmp.lt.s32.totalorder %v61, 1024
    %vm70 = vcmp.lt.s32.totalorder %v62, 1024
    %vm71 = vcmp.lt.s32.totalorder %v63, 1024
    %vm72 = vcmp.lt.s32.totalorder %v64, 1024
    %vm73 = vcmp.lt.s32.totalorder %v65, 1024
    %v74 = vld [vmem:[#allocation4] sm:$0xff]
    %v75 = vld [vmem:[#allocation4 + $0x8] sm:$0xff]
    %78 = vst [vmem:[#allocation1] ss:$4 sm:$0xff] %v74
    %s79 = scalar_lea.vmem [#allocation1], 32
    %80 = vst [vmem:[%s79] ss:$4 sm:$0xff] %v75
    %v81 = vld.sshfl [vmem:[#allocation1] sm:$0xff pattern:$0x73625140]
    %v82 = vld.sshfl [vmem:[#allocation1 + $0x8] sm:$0xff pattern:$0x73625140]
    %v83 = vld.sshfl [vmem:[#allocation1 + $0x10] sm:$0xff pattern:$0x73625140]
    %v84 = vld.sshfl [vmem:[#allocation1 + $0x18] sm:$0xff pattern:$0x73625140]
    %v85 = vld.sshfl [vmem:[#allocation1 + $0x20] sm:$0xff pattern:$0x73625140]
    %v86 = vld.sshfl [vmem:[#allocation1 + $0x28] sm:$0xff pattern:$0x73625140]
    %v87 = vld.sshfl [vmem:[#allocation1 + $0x30] sm:$0xff pattern:$0x73625140]
    %v88 = vld.sshfl [vmem:[#allocation1 + $0x38] sm:$0xff pattern:$0x73625140]
    %v97 = vsel %vm66, %v81, 0.0
    %v98 = vsel %vm67, %v82, 0.0
    %v99 = vsel %vm68, %v83, 0.0
    %v100 = vsel %vm69, %v84, 0.0
    %v101 = vsel %vm70, %v85, 0.0
    %v102 = vsel %vm71, %v86, 0.0
    %v103 = vsel %vm72, %v87, 0.0
    %v104 = vsel %vm73, %v88, 0.0
    %v105 = vld [vmem:[#allocation7] sm:$0xff]
    %v106 = vld [vmem:[#allocation7 + $0x8] sm:$0xff]
    %109 = vst [vmem:[#allocation1] ss:$4 sm:$0xff] %v105
    %s110 = scalar_lea.vmem [#allocation1], 32
    %111 = vst [vmem:[%s110] ss:$4 sm:$0xff] %v106
    %v112 = vld.sshfl [vmem:[#allocation1] sm:$0xff pattern:$0x73625140]
    %v113 = vld.sshfl [vmem:[#allocation1 + $0x8] sm:$0xff pattern:$0x73625140]
    %v114 = vld.sshfl [vmem:[#allocation1 + $0x10] sm:$0xff pattern:$0x73625140]
    %v115 = vld.sshfl [vmem:[#allocation1 + $0x18] sm:$0xff pattern:$0x73625140]
    %v116 = vld.sshfl [vmem:[#allocation1 + $0x20] sm:$0xff pattern:$0x73625140]
    %v117 = vld.sshfl [vmem:[#allocation1 + $0x28] sm:$0xff pattern:$0x73625140]
    %v118 = vld.sshfl [vmem:[#allocation1 + $0x30] sm:$0xff pattern:$0x73625140]
    %v119 = vld.sshfl [vmem:[#allocation1 + $0x38] sm:$0xff pattern:$0x73625140]
    %v128 = vsel %vm66, %v112, 0.0
    %v129 = vsel %vm67, %v113, 0.0
    %v130 = vsel %vm68, %v114, 0.0
    %v131 = vsel %vm69, %v115, 0.0
    %v132 = vsel %vm70, %v116, 0.0
    %v133 = vsel %vm71, %v117, 0.0
    %v134 = vsel %vm72, %v118, 0.0
    %v135 = vsel %vm73, %v119, 0.0
    %vm136 = vcmask 1041408
    %v137 = vsel %vm136, %v97, 0.0
    %v138 = vrot.slane %v137, 4
    %v139 = vadd.f32 %v137, %v138
    %v140 = vrot.slane %v139, 2
    %v141 = vadd.f32 %v139, %v140
    %v142 = vrot.slane %v141, 1
    %v143 = vadd.f32 %v141, %v142
    %v144 = vsel %vm136, %v98, 0.0
    %v145 = vrot.slane %v144, 4
    %v146 = vadd.f32 %v144, %v145
    %v147 = vrot.slane %v146, 2
    %v148 = vadd.f32 %v146, %v147
    %v149 = vrot.slane %v148, 1
    %v150 = vadd.f32 %v148, %v149
    %v151 = vsel %vm136, %v99, 0.0
    %v152 = vrot.slane %v151, 4
    %v153 = vadd.f32 %v151, %v152
    %v154 = vrot.slane %v153, 2
    %v155 = vadd.f32 %v153, %v154
    %v156 = vrot.slane %v155, 1
    %v157 = vadd.f32 %v155, %v156
    %v158 = vsel %vm136, %v100, 0.0
    %v159 = vrot.slane %v158, 4
    %v160 = vadd.f32 %v158, %v159
    %v161 = vrot.slane %v160, 2
    %v162 = vadd.f32 %v160, %v161
    %v163 = vrot.slane %v162, 1
    %v164 = vadd.f32 %v162, %v163
    %v165 = vsel %vm136, %v101, 0.0
    %v166 = vrot.slane %v165, 4
    %v167 = vadd.f32 %v165, %v166
    %v168 = vrot.slane %v167, 2
    %v169 = vadd.f32 %v167, %v168
    %v170 = vrot.slane %v169, 1
    %v171 = vadd.f32 %v169, %v170
    %v172 = vsel %vm136, %v102, 0.0
    %v173 = vrot.slane %v172, 4
    %v174 = vadd.f32 %v172, %v173
    %v175 = vrot.slane %v174, 2
    %v176 = vadd.f32 %v174, %v175
    %v177 = vrot.slane %v176, 1
    %v178 = vadd.f32 %v176, %v177
    %v179 = vsel %vm136, %v103, 0.0
    %v180 = vrot.slane %v179, 4
    %v181 = vadd.f32 %v179, %v180
    %v182 = vrot.slane %v181, 2
    %v183 = vadd.f32 %v181, %v182
    %v184 = vrot.slane %v183, 1
    %v185 = vadd.f32 %v183, %v184
    %v186 = vsel %vm136, %v104, 0.0
    %v187 = vrot.slane %v186, 4
    %v188 = vadd.f32 %v186, %v187
    %v189 = vrot.slane %v188, 2
    %v190 = vadd.f32 %v188, %v189
    %v191 = vrot.slane %v190, 1
    %v192 = vadd.f32 %v190, %v191
    %v193 = vrcp.pop 2.0
    %v194 = vmul.f32 2.0, %v193
    %v195 = vsub.f32 1.0, %v194
    %v196 = vmul.f32 %v193, %v195
    %v197 = vadd.f32 %v193, %v196
    %vm198 = vweird.f32 %v193
    %v199 = vsel %vm198, %v193, %v197
    %v200 = vmul.f32 %v143, %v199
    %v201 = vmul.f32 %v150, %v199
    %v202 = vmul.f32 %v157, %v199
    %v203 = vmul.f32 %v164, %v199
    %v204 = vmul.f32 %v171, %v199
    %v205 = vmul.f32 %v178, %v199
    %v206 = vmul.f32 %v185, %v199
    %v207 = vmul.f32 %v192, %v199
    %v208 = vsub.f32 %v97, %v200
    %v209 = vsub.f32 %v98, %v201
    %v210 = vsub.f32 %v99, %v202
    %v211 = vsub.f32 %v100, %v203
    %v212 = vsub.f32 %v101, %v204
    %v213 = vsub.f32 %v102, %v205
    %v214 = vsub.f32 %v103, %v206
    %v215 = vsub.f32 %v104, %v207
    %v216 = vsel %vm136, %v128, 0.0
    %v217 = vrot.slane %v216, 4
    %v218 = vadd.f32 %v216, %v217
    %v219 = vrot.slane %v218, 2
    %v220 = vadd.f32 %v218, %v219
    %v221 = vrot.slane %v220, 1
    %v222 = vadd.f32 %v220, %v221
    %v223 = vsel %vm136, %v129, 0.0
    %v224 = vrot.slane %v223, 4
    %v225 = vadd.f32 %v223, %v224
    %v226 = vrot.slane %v225, 2
    %v227 = vadd.f32 %v225, %v226
    %v228 = vrot.slane %v227, 1
    %v229 = vadd.f32 %v227, %v228
    %v230 = vsel %vm136, %v130, 0.0
    %v231 = vrot.slane %v230, 4
    %v232 = vadd.f32 %v230, %v231
    %v233 = vrot.slane %v232, 2
    %v234 = vadd.f32 %v232, %v233
    %v235 = vrot.slane %v234, 1
    %v236 = vadd.f32 %v234, %v235
    %v237 = vsel %vm136, %v131, 0.0
    %v238 = vrot.slane %v237, 4
    %v239 = vadd.f32 %v237, %v238
    %v240 = vrot.slane %v239, 2
    %v241 = vadd.f32 %v239, %v240
    %v242 = vrot.slane %v241, 1
    %v243 = vadd.f32 %v241, %v242
    %v244 = vsel %vm136, %v132, 0.0
    %v245 = vrot.slane %v244, 4
    %v246 = vadd.f32 %v244, %v245
    %v247 = vrot.slane %v246, 2
    %v248 = vadd.f32 %v246, %v247
    %v249 = vrot.slane %v248, 1
    %v250 = vadd.f32 %v248, %v249
    %v251 = vsel %vm136, %v133, 0.0
    %v252 = vrot.slane %v251, 4
    %v253 = vadd.f32 %v251, %v252
    %v254 = vrot.slane %v253, 2
    %v255 = vadd.f32 %v253, %v254
    %v256 = vrot.slane %v255, 1
    %v257 = vadd.f32 %v255, %v256
    %v258 = vsel %vm136, %v134, 0.0
    %v259 = vrot.slane %v258, 4
    %v260 = vadd.f32 %v258, %v259
    %v261 = vrot.slane %v260, 2
    %v262 = vadd.f32 %v260, %v261
    %v263 = vrot.slane %v262, 1
    %v264 = vadd.f32 %v262, %v263
    %v265 = vsel %vm136, %v135, 0.0
    %v266 = vrot.slane %v265, 4
    %v267 = vadd.f32 %v265, %v266
    %v268 = vrot.slane %v267, 2
    %v269 = vadd.f32 %v267, %v268
    %v270 = vrot.slane %v269, 1
    %v271 = vadd.f32 %v269, %v270
    %v272 = vmul.f32 %v222, %v199
    %v273 = vmul.f32 %v229, %v199
    %v274 = vmul.f32 %v236, %v199
    %v275 = vmul.f32 %v243, %v199
    %v276 = vmul.f32 %v250, %v199
    %v277 = vmul.f32 %v257, %v199
    %v278 = vmul.f32 %v264, %v199
    %v279 = vmul.f32 %v271, %v199
    %v280 = vsub.f32 %v128, %v272
    %v281 = vsub.f32 %v129, %v273
    %v282 = vsub.f32 %v130, %v274
    %v283 = vsub.f32 %v131, %v275
    %v284 = vsub.f32 %v132, %v276
    %v285 = vsub.f32 %v133, %v277
    %v286 = vsub.f32 %v134, %v278
    %v287 = vsub.f32 %v135, %v279
    %v288 = vld [vmem:[#allocation2] sm:$0x3]
    %289 = vmatpush.xpose.msra.mxu0 0.0
    %290 = vmatpush.xpose.msra.mxu0 0.0
    %291 = vmatpush.xpose.msra.mxu0 0.0
    %292 = vmatpush.xpose.msra.mxu0 0.0
    %293 = vmatpush.xpose.msra.mxu0 0.0
    %294 = vmatpush.xpose.msra.mxu0 0.0
    %295 = vmatpush.xpose.msra.mxu0 0.0
    %296 = vmatpush.xpose.msra.mxu0 0.0
    %297 = vmatpush.xpose.msra.mxu0 0.0
    %298 = vmatpush.xpose.msra.mxu0 0.0
    %299 = vmatpush.xpose.msra.mxu0 0.0
    %300 = vmatpush.xpose.msra.mxu0 0.0
    %301 = vmatpush.xpose.msra.mxu0 0.0
    %302 = vmatpush.xpose.msra.mxu0 0.0
    %303 = vmatpush.xpose.msra.mxu0 0.0
    %304 = vmatpush.xpose.msra.mxu0 %v208
    %305 = vmatmul.f32.gmra.mxu0 %v208
    %v306 = vpop.f32.mrf.mxu0
    %v307 = vadd.f32 0.0, %v306
    %308 = vdwg.mxu0
    %309 = vmatpush.xpose.msra.mxu0 0.0
    %310 = vmatpush.xpose.msra.mxu0 0.0
    %311 = vmatpush.xpose.msra.mxu0 0.0
    %312 = vmatpush.xpose.msra.mxu0 0.0
    %313 = vmatpush.xpose.msra.mxu0 0.0
    %314 = vmatpush.xpose.msra.mxu0 0.0
    %315 = vmatpush.xpose.msra.mxu0 0.0
    %316 = vmatpush.xpose.msra.mxu0 0.0
    %317 = vmatpush.xpose.msra.mxu0 0.0
    %318 = vmatpush.xpose.msra.mxu0 0.0
    %319 = vmatpush.xpose.msra.mxu0 0.0
    %320 = vmatpush.xpose.msra.mxu0 0.0
    %321 = vmatpush.xpose.msra.mxu0 0.0
    %322 = vmatpush.xpose.msra.mxu0 0.0
    %323 = vmatpush.xpose.msra.mxu0 0.0
    %324 = vmatpush.xpose.msra.mxu0 %v209
    %325 = vmatmul.f32.gmra.mxu0 %v209
    %v326 = vpop.f32.mrf.mxu0
    %v327 = vadd.f32 %v307, %v326
    %328 = vdwg.mxu0
    %329 = vmatpush.xpose.msra.mxu0 0.0
    %330 = vmatpush.xpose.msra.mxu0 0.0
    %331 = vmatpush.xpose.msra.mxu0 0.0
    %332 = vmatpush.xpose.msra.mxu0 0.0
    %333 = vmatpush.xpose.msra.mxu0 0.0
    %334 = vmatpush.xpose.msra.mxu0 0.0
    %335 = vmatpush.xpose.msra.mxu0 0.0
    %336 = vmatpush.xpose.msra.mxu0 0.0
    %337 = vmatpush.xpose.msra.mxu0 0.0
    %338 = vmatpush.xpose.msra.mxu0 0.0
    %339 = vmatpush.xpose.msra.mxu0 0.0
    %340 = vmatpush.xpose.msra.mxu0 0.0
    %341 = vmatpush.xpose.msra.mxu0 0.0
    %342 = vmatpush.xpose.msra.mxu0 0.0
    %343 = vmatpush.xpose.msra.mxu0 0.0
    %344 = vmatpush.xpose.msra.mxu0 %v210
    %345 = vmatmul.f32.gmra.mxu0 %v210
    %v346 = vpop.f32.mrf.mxu0
    %v347 = vadd.f32 %v327, %v346
    %348 = vdwg.mxu0
    %349 = vmatpush.xpose.msra.mxu0 0.0
    %350 = vmatpush.xpose.msra.mxu0 0.0
    %351 = vmatpush.xpose.msra.mxu0 0.0
    %352 = vmatpush.xpose.msra.mxu0 0.0
    %353 = vmatpush.xpose.msra.mxu0 0.0
    %354 = vmatpush.xpose.msra.mxu0 0.0
    %355 = vmatpush.xpose.msra.mxu0 0.0
    %356 = vmatpush.xpose.msra.mxu0 0.0
    %357 = vmatpush.xpose.msra.mxu0 0.0
    %358 = vmatpush.xpose.msra.mxu0 0.0
    %359 = vmatpush.xpose.msra.mxu0 0.0
    %360 = vmatpush.xpose.msra.mxu0 0.0
    %361 = vmatpush.xpose.msra.mxu0 0.0
    %362 = vmatpush.xpose.msra.mxu0 0.0
    %363 = vmatpush.xpose.msra.mxu0 0.0
    %364 = vmatpush.xpose.msra.mxu0 %v211
    %365 = vmatmul.f32.gmra.mxu0 %v211
    %v366 = vpop.f32.mrf.mxu0
    %v367 = vadd.f32 %v347, %v366
    %368 = vdwg.mxu0
    %369 = vmatpush.xpose.msra.mxu0 0.0
    %370 = vmatpush.xpose.msra.mxu0 0.0
    %371 = vmatpush.xpose.msra.mxu0 0.0
    %372 = vmatpush.xpose.msra.mxu0 0.0
    %373 = vmatpush.xpose.msra.mxu0 0.0
    %374 = vmatpush.xpose.msra.mxu0 0.0
    %375 = vmatpush.xpose.msra.mxu0 0.0
    %376 = vmatpush.xpose.msra.mxu0 0.0
    %377 = vmatpush.xpose.msra.mxu0 0.0
    %378 = vmatpush.xpose.msra.mxu0 0.0
    %379 = vmatpush.xpose.msra.mxu0 0.0
    %380 = vmatpush.xpose.msra.mxu0 0.0
    %381 = vmatpush.xpose.msra.mxu0 0.0
    %382 = vmatpush.xpose.msra.mxu0 0.0
    %383 = vmatpush.xpose.msra.mxu0 0.0
    %384 = vmatpush.xpose.msra.mxu0 %v212
    %385 = vmatmul.f32.gmra.mxu0 %v212
    %v386 = vpop.f32.mrf.mxu0
    %v387 = vadd.f32 %v367, %v386
    %388 = vdwg.mxu0
    %389 = vmatpush.xpose.msra.mxu0 0.0
    %390 = vmatpush.xpose.msra.mxu0 0.0
    %391 = vmatpush.xpose.msra.mxu0 0.0
    %392 = vmatpush.xpose.msra.mxu0 0.0
    %393 = vmatpush.xpose.msra.mxu0 0.0
    %394 = vmatpush.xpose.msra.mxu0 0.0
    %395 = vmatpush.xpose.msra.mxu0 0.0
    %396 = vmatpush.xpose.msra.mxu0 0.0
    %397 = vmatpush.xpose.msra.mxu0 0.0
    %398 = vmatpush.xpose.msra.mxu0 0.0
    %399 = vmatpush.xpose.msra.mxu0 0.0
    %400 = vmatpush.xpose.msra.mxu0 0.0
    %401 = vmatpush.xpose.msra.mxu0 0.0
    %402 = vmatpush.xpose.msra.mxu0 0.0
    %403 = vmatpush.xpose.msra.mxu0 0.0
    %404 = vmatpush.xpose.msra.mxu0 %v213
    %405 = vmatmul.f32.gmra.mxu0 %v213
    %v406 = vpop.f32.mrf.mxu0
    %v407 = vadd.f32 %v387, %v406
    %408 = vdwg.mxu0
    %409 = vmatpush.xpose.msra.mxu0 0.0
    %410 = vmatpush.xpose.msra.mxu0 0.0
    %411 = vmatpush.xpose.msra.mxu0 0.0
    %412 = vmatpush.xpose.msra.mxu0 0.0
    %413 = vmatpush.xpose.msra.mxu0 0.0
    %414 = vmatpush.xpose.msra.mxu0 0.0
    %415 = vmatpush.xpose.msra.mxu0 0.0
    %416 = vmatpush.xpose.msra.mxu0 0.0
    %417 = vmatpush.xpose.msra.mxu0 0.0
    %418 = vmatpush.xpose.msra.mxu0 0.0
    %419 = vmatpush.xpose.msra.mxu0 0.0
    %420 = vmatpush.xpose.msra.mxu0 0.0
    %421 = vmatpush.xpose.msra.mxu0 0.0
    %422 = vmatpush.xpose.msra.mxu0 0.0
    %423 = vmatpush.xpose.msra.mxu0 0.0
    %424 = vmatpush.xpose.msra.mxu0 %v214
    %425 = vmatmul.f32.gmra.mxu0 %v214
    %v426 = vpop.f32.mrf.mxu0
    %v427 = vadd.f32 %v407, %v426
    %428 = vdwg.mxu0
    %429 = vmatpush.xpose.msra.mxu0 0.0
    %430 = vmatpush.xpose.msra.mxu0 0.0
    %431 = vmatpush.xpose.msra.mxu0 0.0
    %432 = vmatpush.xpose.msra.mxu0 0.0
    %433 = vmatpush.xpose.msra.mxu0 0.0
    %434 = vmatpush.xpose.msra.mxu0 0.0
    %435 = vmatpush.xpose.msra.mxu0 0.0
    %436 = vmatpush.xpose.msra.mxu0 0.0
    %437 = vmatpush.xpose.msra.mxu0 0.0
    %438 = vmatpush.xpose.msra.mxu0 0.0
    %439 = vmatpush.xpose.msra.mxu0 0.0
    %440 = vmatpush.xpose.msra.mxu0 0.0
    %441 = vmatpush.xpose.msra.mxu0 0.0
    %442 = vmatpush.xpose.msra.mxu0 0.0
    %443 = vmatpush.xpose.msra.mxu0 0.0
    %444 = vmatpush.xpose.msra.mxu0 %v215
    %445 = vmatmul.f32.gmra.mxu0 %v215
    %v446 = vpop.f32.mrf.mxu0
    %v447 = vadd.f32 %v427, %v446
    %448 = vdwg.mxu0
    %v449 = vadd.f32 %v288, %v447
    %vm450 = vcmask 9216
    %451 = vst.msk [vmem:[#allocation2] sm:$0x3] %vm450, %v449
    %v452 = vld [vmem:[#allocation3] sm:$0x3]
    %453 = vmatpush.xpose.msra.mxu0 0.0
    %454 = vmatpush.xpose.msra.mxu0 0.0
    %455 = vmatpush.xpose.msra.mxu0 0.0
    %456 = vmatpush.xpose.msra.mxu0 0.0
    %457 = vmatpush.xpose.msra.mxu0 0.0
    %458 = vmatpush.xpose.msra.mxu0 0.0
    %459 = vmatpush.xpose.msra.mxu0 0.0
    %460 = vmatpush.xpose.msra.mxu0 0.0
    %461 = vmatpush.xpose.msra.mxu0 0.0
    %462 = vmatpush.xpose.msra.mxu0 0.0
    %463 = vmatpush.xpose.msra.mxu0 0.0
    %464 = vmatpush.xpose.msra.mxu0 0.0
    %465 = vmatpush.xpose.msra.mxu0 0.0
    %466 = vmatpush.xpose.msra.mxu0 0.0
    %467 = vmatpush.xpose.msra.mxu0 0.0
    %468 = vmatpush.xpose.msra.mxu0 %v280
    %469 = vmatmul.f32.gmra.mxu0 %v280
    %v470 = vpop.f32.mrf.mxu0
    %v471 = vadd.f32 0.0, %v470
    %472 = vdwg.mxu0
    %473 = vmatpush.xpose.msra.mxu0 0.0
    %474 = vmatpush.xpose.msra.mxu0 0.0
    %475 = vmatpush.xpose.msra.mxu0 0.0
    %476 = vmatpush.xpose.msra.mxu0 0.0
    %477 = vmatpush.xpose.msra.mxu0 0.0
    %478 = vmatpush.xpose.msra.mxu0 0.0
    %479 = vmatpush.xpose.msra.mxu0 0.0
    %480 = vmatpush.xpose.msra.mxu0 0.0
    %481 = vmatpush.xpose.msra.mxu0 0.0
    %482 = vmatpush.xpose.msra.mxu0 0.0
    %483 = vmatpush.xpose.msra.mxu0 0.0
    %484 = vmatpush.xpose.msra.mxu0 0.0
    %485 = vmatpush.xpose.msra.mxu0 0.0
    %486 = vmatpush.xpose.msra.mxu0 0.0
    %487 = vmatpush.xpose.msra.mxu0 0.0
    %488 = vmatpush.xpose.msra.mxu0 %v281
    %489 = vmatmul.f32.gmra.mxu0 %v281
    %v490 = vpop.f32.mrf.mxu0
    %v491 = vadd.f32 %v471, %v490
    %492 = vdwg.mxu0
    %493 = vmatpush.xpose.msra.mxu0 0.0
    %494 = vmatpush.xpose.msra.mxu0 0.0
    %495 = vmatpush.xpose.msra.mxu0 0.0
    %496 = vmatpush.xpose.msra.mxu0 0.0
    %497 = vmatpush.xpose.msra.mxu0 0.0
    %498 = vmatpush.xpose.msra.mxu0 0.0
    %499 = vmatpush.xpose.msra.mxu0 0.0
    %500 = vmatpush.xpose.msra.mxu0 0.0
    %501 = vmatpush.xpose.msra.mxu0 0.0
    %502 = vmatpush.xpose.msra.mxu0 0.0
    %503 = vmatpush.xpose.msra.mxu0 0.0
    %504 = vmatpush.xpose.msra.mxu0 0.0
    %505 = vmatpush.xpose.msra.mxu0 0.0
    %506 = vmatpush.xpose.msra.mxu0 0.0
    %507 = vmatpush.xpose.msra.mxu0 0.0
    %508 = vmatpush.xpose.msra.mxu0 %v282
    %509 = vmatmul.f32.gmra.mxu0 %v282
    %v510 = vpop.f32.mrf.mxu0
    %v511 = vadd.f32 %v491, %v510
    %512 = vdwg.mxu0
    %513 = vmatpush.xpose.msra.mxu0 0.0
    %514 = vmatpush.xpose.msra.mxu0 0.0
    %515 = vmatpush.xpose.msra.mxu0 0.0
    %516 = vmatpush.xpose.msra.mxu0 0.0
    %517 = vmatpush.xpose.msra.mxu0 0.0
    %518 = vmatpush.xpose.msra.mxu0 0.0
    %519 = vmatpush.xpose.msra.mxu0 0.0
    %520 = vmatpush.xpose.msra.mxu0 0.0
    %521 = vmatpush.xpose.msra.mxu0 0.0
    %522 = vmatpush.xpose.msra.mxu0 0.0
    %523 = vmatpush.xpose.msra.mxu0 0.0
    %524 = vmatpush.xpose.msra.mxu0 0.0
    %525 = vmatpush.xpose.msra.mxu0 0.0
    %526 = vmatpush.xpose.msra.mxu0 0.0
    %527 = vmatpush.xpose.msra.mxu0 0.0
    %528 = vmatpush.xpose.msra.mxu0 %v283
    %529 = vmatmul.f32.gmra.mxu0 %v283
    %v530 = vpop.f32.mrf.mxu0
    %v531 = vadd.f32 %v511, %v530
    %532 = vdwg.mxu0
    %533 = vmatpush.xpose.msra.mxu0 0.0
    %534 = vmatpush.xpose.msra.mxu0 0.0
    %535 = vmatpush.xpose.msra.mxu0 0.0
    %536 = vmatpush.xpose.msra.mxu0 0.0
    %537 = vmatpush.xpose.msra.mxu0 0.0
    %538 = vmatpush.xpose.msra.mxu0 0.0
    %539 = vmatpush.xpose.msra.mxu0 0.0
    %540 = vmatpush.xpose.msra.mxu0 0.0
    %541 = vmatpush.xpose.msra.mxu0 0.0
    %542 = vmatpush.xpose.msra.mxu0 0.0
    %543 = vmatpush.xpose.msra.mxu0 0.0
    %544 = vmatpush.xpose.msra.mxu0 0.0
    %545 = vmatpush.xpose.msra.mxu0 0.0
    %546 = vmatpush.xpose.msra.mxu0 0.0
    %547 = vmatpush.xpose.msra.mxu0 0.0
    %548 = vmatpush.xpose.msra.mxu0 %v284
    %549 = vmatmul.f32.gmra.mxu0 %v284
    %v550 = vpop.f32.mrf.mxu0
    %v551 = vadd.f32 %v531, %v550
    %552 = vdwg.mxu0
    %553 = vmatpush.xpose.msra.mxu0 0.0
    %554 = vmatpush.xpose.msra.mxu0 0.0
    %555 = vmatpush.xpose.msra.mxu0 0.0
    %556 = vmatpush.xpose.msra.mxu0 0.0
    %557 = vmatpush.xpose.msra.mxu0 0.0
    %558 = vmatpush.xpose.msra.mxu0 0.0
    %559 = vmatpush.xpose.msra.mxu0 0.0
    %560 = vmatpush.xpose.msra.mxu0 0.0
    %561 = vmatpush.xpose.msra.mxu0 0.0
    %562 = vmatpush.xpose.msra.mxu0 0.0
    %563 = vmatpush.xpose.msra.mxu0 0.0
    %564 = vmatpush.xpose.msra.mxu0 0.0
    %565 = vmatpush.xpose.msra.mxu0 0.0
    %566 = vmatpush.xpose.msra.mxu0 0.0
    %567 = vmatpush.xpose.msra.mxu0 0.0
    %568 = vmatpush.xpose.msra.mxu0 %v285
    %569 = vmatmul.f32.gmra.mxu0 %v285
    %v570 = vpop.f32.mrf.mxu0
    %v571 = vadd.f32 %v551, %v570
    %572 = vdwg.mxu0
    %573 = vmatpush.xpose.msra.mxu0 0.0
    %574 = vmatpush.xpose.msra.mxu0 0.0
    %575 = vmatpush.xpose.msra.mxu0 0.0
    %576 = vmatpush.xpose.msra.mxu0 0.0
    %577 = vmatpush.xpose.msra.mxu0 0.0
    %578 = vmatpush.xpose.msra.mxu0 0.0
    %579 = vmatpush.xpose.msra.mxu0 0.0
    %580 = vmatpush.xpose.msra.mxu0 0.0
    %581 = vmatpush.xpose.msra.mxu0 0.0
    %582 = vmatpush.xpose.msra.mxu0 0.0
    %583 = vmatpush.xpose.msra.mxu0 0.0
    %584 = vmatpush.xpose.msra.mxu0 0.0
    %585 = vmatpush.xpose.msra.mxu0 0.0
    %586 = vmatpush.xpose.msra.mxu0 0.0
    %587 = vmatpush.xpose.msra.mxu0 0.0
    %588 = vmatpush.xpose.msra.mxu0 %v286
    %589 = vmatmul.f32.gmra.mxu0 %v286
    %v590 = vpop.f32.mrf.mxu0
    %v591 = vadd.f32 %v571, %v590
    %592 = vdwg.mxu0
    %593 = vmatpush.xpose.msra.mxu0 0.0
    %594 = vmatpush.xpose.msra.mxu0 0.0
    %595 = vmatpush.xpose.msra.mxu0 0.0
    %596 = vmatpush.xpose.msra.mxu0 0.0
    %597 = vmatpush.xpose.msra.mxu0 0.0
    %598 = vmatpush.xpose.msra.mxu0 0.0
    %599 = vmatpush.xpose.msra.mxu0 0.0
    %600 = vmatpush.xpose.msra.mxu0 0.0
    %601 = vmatpush.xpose.msra.mxu0 0.0
    %602 = vmatpush.xpose.msra.mxu0 0.0
    %603 = vmatpush.xpose.msra.mxu0 0.0
    %604 = vmatpush.xpose.msra.mxu0 0.0
    %605 = vmatpush.xpose.msra.mxu0 0.0
    %606 = vmatpush.xpose.msra.mxu0 0.0
    %607 = vmatpush.xpose.msra.mxu0 0.0
    %608 = vmatpush.xpose.msra.mxu0 %v287
    %609 = vmatmul.f32.gmra.mxu0 %v287
    %v610 = vpop.f32.mrf.mxu0
    %v611 = vadd.f32 %v591, %v610
    %612 = vdwg.mxu0
    %v613 = vadd.f32 %v452, %v611
    %614 = vst.msk [vmem:[#allocation3] sm:$0x3] %vm450, %v613
    // Predicated region
    $region22: #{tpu_custom_call.1} parent=1 // pred_check
      %p615 = pneg %p40
    $region23: #{tpu_custom_call.1} parent=1 // pred_check_branch
      %617 = sbr.rel (%p615) target = $region25
    $region24: #{tpu_custom_call.1} parent=1 // pred_region
      %v618 = vld [vmem:[#allocation2] sm:$0x3]
      %v619 = vld [vmem:[#allocation3] sm:$0x3]
      %v620 = vlaneseq
      %v621 = vshrl.u32 %v620, 7
      %vm622 = vcmp.eq.s32.totalorder %v621, %v49
      %v623 = vsel %vm622, %v618, 0.0
      %v624 = vsel %vm450, %v623, 0.0
      %625 = vadd.xlane.f32.xlu0 %v624
      %v626 = vpop.xlane.xlu0 %625
      %v627 = vrot.slane %v624, 4
      %v628 = vadd.f32 %v624, %v627
      %v629 = vrot.slane %v628, 2
      %v630 = vadd.f32 %v628, %v629
      %v631 = vrot.slane %v630, 1
      %v632 = vadd.f32 %v630, %v631
      %v633 = vsel %vm622, %v619, 0.0
      %v634 = vsel %vm450, %v633, 0.0
      %635 = vadd.xlane.f32.xlu0 %v634
      %v636 = vpop.xlane.xlu0 %635
      %v637 = vrot.slane %v634, 4
      %v638 = vadd.f32 %v634, %v637
      %v639 = vrot.slane %v638, 2
      %v640 = vadd.f32 %v638, %v639
      %v641 = vrot.slane %v640, 1
      %v642 = vadd.f32 %v640, %v641
      %v643 = vrsqrt.pop %v626
      %v644 = vmul.f32 %v643, %v626
      %v645 = vmul.f32 %v644, %v643
      %v646 = vmul.f32 0.5, %v645
      %v647 = vsub.f32 1.5, %v646
      %v648 = vmul.f32 %v643, %v647
      %v649 = vmul.f32 %v626, %v648
      %vm650 = vcmp.eq.f32.partialorder %v626, inf
      %v651 = vsel %vm650, %v626, %v649
      %vm652 = vcmp.eq.f32.partialorder %v626, 0.0
      %v653 = vand.u32 %v626, 2147483648
      %v654 = vsel %vm652, %v653, %v651
      %v655 = vadd.f32 %v654, 1e-06
      %v656 = vrcp.pop %v655
      %v657 = vmul.f32 %v655, %v656
      %v658 = vsub.f32 1.0, %v657
      %v659 = vmul.f32 %v656, %v658
      %v660 = vadd.f32 %v656, %v659
      %vm661 = vweird.f32 %v655
      %vm662 = vweird.f32 %v656
      %vm663 = vmor %vm661, %vm662
      %v664 = vsel %vm663, %v656, %v660
      %v665 = vand.u32 2147483647, %v655
      %vm666 = vcmp.eq.f32.partialorder %v665, 8.507059e+37
      %v667 = vand.u32 %v655, 2147483648
      %v668 = vor.u32 1.1754944e-38, %v667
      %v669 = vsel %vm666, %v668, %v664
      %v670 = vmul.f32 1.0, %v669
      %v671 = vmul.f32 %v618, %v670
      %v672 = vrsqrt.pop %v632
      %v673 = vmul.f32 %v672, %v632
      %v674 = vmul.f32 %v673, %v672
      %v675 = vmul.f32 0.5, %v674
      %v676 = vsub.f32 1.5, %v675
      %v677 = vmul.f32 %v672, %v676
      %v678 = vmul.f32 %v632, %v677
      %vm679 = vcmp.eq.f32.partialorder %v632, inf
      %v680 = vsel %vm679, %v632, %v678
      %vm681 = vcmp.eq.f32.partialorder %v632, 0.0
      %v682 = vand.u32 %v632, 2147483648
      %v683 = vsel %vm681, %v682, %v680
      %v684 = vadd.f32 %v683, 1e-06
      %v685 = vrcp.pop %v684
      %v686 = vmul.f32 %v684, %v685
      %v687 = vsub.f32 1.0, %v686
      %v688 = vmul.f32 %v685, %v687
      %v689 = vadd.f32 %v685, %v688
      %vm690 = vweird.f32 %v684
      %vm691 = vweird.f32 %v685
      %vm692 = vmor %vm690, %vm691
      %v693 = vsel %vm692, %v685, %v689
      %v694 = vand.u32 2147483647, %v684
      %vm695 = vcmp.eq.f32.partialorder %v694, 8.507059e+37
      %v696 = vand.u32 %v684, 2147483648
      %v697 = vor.u32 1.1754944e-38, %v696
      %v698 = vsel %vm695, %v697, %v693
      %v699 = vmul.f32 1.0, %v698
      %v700 = vmul.f32 %v671, %v699
      %v701 = vrsqrt.pop %v636
      %v702 = vmul.f32 %v701, %v636
      %v703 = vmul.f32 %v702, %v701
      %v704 = vmul.f32 0.5, %v703
      %v705 = vsub.f32 1.5, %v704
      %v706 = vmul.f32 %v701, %v705
      %v707 = vmul.f32 %v636, %v706
      %vm708 = vcmp.eq.f32.partialorder %v636, inf
      %v709 = vsel %vm708, %v636, %v707
      %vm710 = vcmp.eq.f32.partialorder %v636, 0.0
      %v711 = vand.u32 %v636, 2147483648
      %v712 = vsel %vm710, %v711, %v709
      %v713 = vadd.f32 %v712, 1e-06
      %v714 = vrcp.pop %v713
      %v715 = vmul.f32 %v713, %v714
      %v716 = vsub.f32 1.0, %v715
      %v717 = vmul.f32 %v714, %v716
      %v718 = vadd.f32 %v714, %v717
      %vm719 = vweird.f32 %v713
      %vm720 = vweird.f32 %v714
      %vm721 = vmor %vm719, %vm720
      %v722 = vsel %vm721, %v714, %v718
      %v723 = vand.u32 2147483647, %v713
      %vm724 = vcmp.eq.f32.partialorder %v723, 8.507059e+37
      %v725 = vand.u32 %v713, 2147483648
      %v726 = vor.u32 1.1754944e-38, %v725
      %v727 = vsel %vm724, %v726, %v722
      %v728 = vmul.f32 1.0, %v727
      %v729 = vmul.f32 %v619, %v728
      %v730 = vrsqrt.pop %v642
      %v731 = vmul.f32 %v730, %v642
      %v732 = vmul.f32 %v731, %v730
      %v733 = vmul.f32 0.5, %v732
      %v734 = vsub.f32 1.5, %v733
      %v735 = vmul.f32 %v730, %v734
      %v736 = vmul.f32 %v642, %v735
      %vm737 = vcmp.eq.f32.partialorder %v642, inf
      %v738 = vsel %vm737, %v642, %v736
      %vm739 = vcmp.eq.f32.partialorder %v642, 0.0
      %v740 = vand.u32 %v642, 2147483648
      %v741 = vsel %vm739, %v740, %v738
      %v742 = vadd.f32 %v741, 1e-06
      %v743 = vrcp.pop %v742
      %v744 = vmul.f32 %v742, %v743
      %v745 = vsub.f32 1.0, %v744
      %v746 = vmul.f32 %v743, %v745
      %v747 = vadd.f32 %v743, %v746
      %vm748 = vweird.f32 %v742
      %vm749 = vweird.f32 %v743
      %vm750 = vmor %vm748, %vm749
      %v751 = vsel %vm750, %v743, %v747
      %v752 = vand.u32 2147483647, %v742
      %vm753 = vcmp.eq.f32.partialorder %v752, 8.507059e+37
      %v754 = vand.u32 %v742, 2147483648
      %v755 = vor.u32 1.1754944e-38, %v754
      %v756 = vsel %vm753, %v755, %v751
      %v757 = vmul.f32 1.0, %v756
      %v758 = vmul.f32 %v729, %v757
      %v759 = vmul.f32 %v700, %v758
      %v760 = vsel %vm450, %v759, 0.0
      %761 = vadd.xlane.f32.xlu0 %v760
      %v762 = vpop.xlane.xlu0 %761
      %v763 = vrot.slane %v762, 4
      %v764 = vadd.f32 %v762, %v763
      %v765 = vrot.slane %v764, 2
      %v766 = vadd.f32 %v764, %v765
      %v767 = vrot.slane %v766, 1
      %v768 = vadd.f32 %v766, %v767
      %s769 = vtos %v768
      %s770 = smul.f32 %s769, 9.536743e-07
      %s771 = scalar_lea.smem [#allocation9], 0
      %772 = sst [smem:[%s771]] %s770
    $region25: #{tpu_custom_call.1} parent=1 // pred_fallthru
      _
    // Predicated region
    $region26: #{tpu_custom_call.1} parent=1 // pred_check
      _
    $region27: #{tpu_custom_call.1} parent=1 // pred_check_branch
      %774 = sbr.rel (0) target = $region29
    $region28: #{tpu_custom_call.1} parent=1 // pred_region
      %776 = vsyncadd [#allocation6], 0
      %s778 = sshll.u32 %s2, 4
      %s779 = int_to_ptr.hbm [resolvable:$true] %s778
      %781 = dma.smem_to_hbm [#allocation9], 16, %s779, [#allocation6]
    $region29: #{tpu_custom_call.1} parent=1 // pred_fallthru
      _
    // Predicated region
    $region30: #{tpu_custom_call.1} parent=1 // pred_check
      _
    $region31: #{tpu_custom_call.1} parent=1 // pred_check_branch
      %783 = sbr.rel (0) target = $region33
    $region32: #{tpu_custom_call.1} parent=1 // pred_region
      %785 = dma.done [#allocation6], 16
    $region33: #{tpu_custom_call.1} parent=1 // pred_fallthru
      _
    %786 = sfence
    %787 = vsyncpa [#allocation5], 1
    %788 = vsyncpa [#allocation8], 1
    %789 = vsyncpa [#allocation6], 1

</llo_original>
